<compile_context>
chip_gen: v7x
topology: tpu7x:2x2x1
jax: 0.10.0
libtpu: 0.0.40
codegen_flags: <defaults>
</compile_context>

<pallas_src>
import functools

import jax
import jax.numpy as jnp
from jax import lax
from jax.experimental import pallas as pl
from jax.experimental.pallas import tpu as pltpu


# ---------------------------------------------------------------------------
# Kernel bodies (feature-major: x is (D, tb) with batch on the lane axis)
# ---------------------------------------------------------------------------

def _mlp_t(xT, w1t, b1t, w2t, b2t, apply_nonlinear):
    """yT = [tanh]( W2^T @ tanh(W1^T @ xT + b1^T) + b2^T ), all f32.

    Shapes: xT (D, tb), w1t (H, D), b1t (H, 1), w2t (D, H), b2t (D, 1) -> (D, tb).
    """
    h = jnp.dot(w1t, xT, preferred_element_type=jnp.float32)
    h = jnp.tanh(h + b1t)                      # bias broadcasts over lanes (batch)
    y = jnp.dot(w2t, h, preferred_element_type=jnp.float32)
    y = y + b2t
    if apply_nonlinear:                        # ODEFunc.nonlinear (static choice)
        y = jnp.tanh(y)
    return y


def _odefunc_kernel(x_ref, w1t_ref, b1t_ref, w2t_ref, b2t_ref, o_ref,
                    *, apply_nonlinear: bool):
    """Single ODEFunc.forward evaluation on one (D, tb) batch tile."""
    xT = x_ref[...].astype(jnp.float32)
    y = _mlp_t(xT,
               w1t_ref[...].astype(jnp.float32),
               b1t_ref[...].astype(jnp.float32),
               w2t_ref[...].astype(jnp.float32),
               b2t_ref[...].astype(jnp.float32),
               apply_nonlinear)
    o_ref[...] = y.astype(o_ref.dtype)


def _ode_euler_kernel(x_ref, w1t_ref, b1t_ref, w2t_ref, b2t_ref, dt_ref, o_ref,
                      *, apply_nonlinear: bool, n_steps: int):
    """Fused explicit-Euler integration: all steps inside one grid point.

    Weight/bias loads hoisted above the step loop; state carried as a local f32
    value (lives in vregs / VMEM, never round-trips HBM); output written once.
    """
    w1t = w1t_ref[...].astype(jnp.float32)
    b1t = b1t_ref[...].astype(jnp.float32)
    w2t = w2t_ref[...].astype(jnp.float32)
    b2t = b2t_ref[...].astype(jnp.float32)
    dt = dt_ref[0]                              # SMEM scalar (sreg read)
    x0 = x_ref[...].astype(jnp.float32)

    def body(_, x):
        dx = _mlp_t(x, w1t, b1t, w2t, b2t, apply_nonlinear)
        return x + dt * dx

    xT = lax.fori_loop(0, n_steps, body, x0, unroll=(n_steps <= 16))
    o_ref[...] = xT.astype(o_ref.dtype)


# ---------------------------------------------------------------------------
# Tile sizing
# ---------------------------------------------------------------------------

# Keep double-buffered (D, tb) f32 in/out tiles comfortably under the scoped
# VMEM default (32 MiB on v6e/v7x; v7x physical VMEM is only 64 MiB).
_MAX_TB = 32768


def _num_tensorcores_per_chip():
    try:
        kind = jax.devices()[0].device_kind.lower()
        if "v7" in kind or "7x" in kind:
            return 2
    except Exception:
        pass
    return 1


def _batch_tile(B):
    """Lane-axis (batch) tile: whole batch on 1-TC chips, >=2 blocks on v7x."""
    n_tc = _num_tensorcores_per_chip()
    if B <= _MAX_TB:
        if n_tc > 1 and B % (n_tc * 128) == 0:
            return B // n_tc          # exactly one block per TensorCore (v7x)
        return B                      # single grid point: zero per-step overhead
    tb = _MAX_TB
    while tb >= 128:
        if B % tb == 0:
            return tb
        tb -= 128
    return B


# ---------------------------------------------------------------------------
# Wrappers (public API stays batch-major (B, D), PyTorch-style params)
# ---------------------------------------------------------------------------

@functools.partial(jax.jit, static_argnames=("nonlinear",))
def odefunc_forward(t, x, params, *, nonlinear: bool = True):
    """Pallas-backed ODEFunc.forward(t, x).  `t` is ignored (as in PyTorch)."""
    del t
    w1, b1, w2, b2 = params
    B, D = x.shape
    H = w1.shape[1]
    assert w1.shape == (D, H) and b1.shape == (1, H)
    assert w2.shape == (H, D) and b2.shape == (1, D)

    tb = _batch_tile(B)
    kernel = functools.partial(_odefunc_kernel, apply_nonlinear=nonlinear)

    # Feature-major layout plumbing (lane-dense batch axis inside the kernel).
    xT, w1t, b1t, w2t, b2t = x.T, w1.T, b1.T, w2.T, b2.T

    yT = pl.pallas_call(
        kernel,
        out_shape=jax.ShapeDtypeStruct((D, B), x.dtype),
        grid_spec=pltpu.PrefetchScalarGridSpec(
            num_scalar_prefetch=0,
            grid=(B // tb,),
            in_specs=[
                pl.BlockSpec((D, tb), lambda i: (0, i)),
                pl.BlockSpec((H, D), lambda i: (0, 0)),   # weights resident in VMEM
                pl.BlockSpec((H, 1), lambda i: (0, 0)),
                pl.BlockSpec((D, H), lambda i: (0, 0)),
                pl.BlockSpec((D, 1), lambda i: (0, 0)),
            ],
            out_specs=pl.BlockSpec((D, tb), lambda i: (0, i)),
        ),
        compiler_params=pltpu.CompilerParams(
            dimension_semantics=("parallel",)),           # v7x: both TensorCores
    )(xT, w1t, b1t, w2t, b2t)
    return yT.T


@functools.partial(jax.jit, static_argnames=("n_steps", "nonlinear"))
def odefunc_euler_integrate(x0, params, dt, *, n_steps: int,
                            nonlinear: bool = True):
    """x_{k+1} = x_k + dt * ODEFunc(t, x_k), all steps fused in one pallas_call."""
    w1, b1, w2, b2 = params
    B, D = x0.shape
    H = w1.shape[1]
    assert w1.shape == (D, H) and b1.shape == (1, H)
    assert w2.shape == (H, D) and b2.shape == (1, D)

    tb = _batch_tile(B)
    kernel = functools.partial(_ode_euler_kernel,
                               apply_nonlinear=nonlinear, n_steps=int(n_steps))

    xT, w1t, b1t, w2t, b2t = x0.T, w1.T, b1.T, w2.T, b2.T
    dt_arr = jnp.asarray(dt, jnp.float32).reshape((1,))   # runtime SMEM scalar

    yT = pl.pallas_call(
        kernel,
        out_shape=jax.ShapeDtypeStruct((D, B), x0.dtype),
        grid_spec=pltpu.PrefetchScalarGridSpec(
            num_scalar_prefetch=0,
            grid=(B // tb,),                               # no step axis: fori_loop
            in_specs=[
                pl.BlockSpec((D, tb), lambda i: (0, i)),
                pl.BlockSpec((H, D), lambda i: (0, 0)),
                pl.BlockSpec((H, 1), lambda i: (0, 0)),
                pl.BlockSpec((D, H), lambda i: (0, 0)),
                pl.BlockSpec((D, 1), lambda i: (0, 0)),
                pl.BlockSpec(memory_space=pltpu.MemorySpace.SMEM),   # dt
            ],
            out_specs=pl.BlockSpec((D, tb), lambda i: (0, i)),
        ),
        compiler_params=pltpu.CompilerParams(
            dimension_semantics=("parallel",)),
    )(xT, w1t, b1t, w2t, b2t, dt_arr)
    return yT.T


# ---------------------------------------------------------------------------
# References & init
# ---------------------------------------------------------------------------

def _reference_forward(t, x, params, *, nonlinear: bool = True):
    del t
    w1, b1, w2, b2 = params
    h = jnp.tanh(x.astype(jnp.float32) @ w1 + b1)
    y = h @ w2 + b2
    if nonlinear:
        y = jnp.tanh(y)
    return y.astype(x.dtype)


def _reference_euler(x0, params, *, n_steps: int, dt: float,
                     nonlinear: bool = True):
    x = x0.astype(jnp.float32)
    for _ in range(n_steps):
        dx = _reference_forward(None, x, params, nonlinear=nonlinear)
        x = x + jnp.float32(dt) * dx
    return x.astype(x0.dtype)


def init_params(key, in_dim, hidden_dim, dtype=jnp.float32):
    """Deterministic synthetic init (matches nn.Linear shapes, pre-transposed)."""
    k1, k2, k3, k4 = jax.random.split(key, 4)
    scale1 = 1.0 / jnp.sqrt(in_dim)
    scale2 = 1.0 / jnp.sqrt(hidden_dim)
    w1 = (jax.random.uniform(k1, (in_dim, hidden_dim), minval=-1, maxval=1)
          * scale1).astype(dtype)
    b1 = (jax.random.uniform(k2, (1, hidden_dim), minval=-1, maxval=1)
          * scale1).astype(dtype)
    w2 = (jax.random.uniform(k3, (hidden_dim, in_dim), minval=-1, maxval=1)
          * scale2).astype(dtype)
    b2 = (jax.random.uniform(k4, (1, in_dim), minval=-1, maxval=1)
          * scale2).astype(dtype)
    return w1, b1, w2, b2


if __name__ == "__main__":
    key = jax.random.PRNGKey(0)
    k_x, k_p = jax.random.split(key)

    # Batched so lanes/MXU are filled: lane-dense batch of 256, state dim 32.
    B, D, H = 256, 32, 64
    x = jax.random.normal(k_x, (B, D), dtype=jnp.float32)
    params = init_params(k_p, D, H)
    t = jnp.float32(0.0)         # ignored by ODEFunc.forward, kept for API parity

    # 1) Single ODEFunc.forward (the module's semantics).
    out = odefunc_forward(t, x, params, nonlinear=True)
    out = jax.block_until_ready(out)
    ref = _reference_forward(t, x, params, nonlinear=True)
    assert out.shape == (B, D)
    assert jnp.allclose(out, ref, atol=1e-5, rtol=1e-5), "forward mismatch vs reference"

    # 2) Fused Euler integration: all steps inside one pallas_call, weights
    #    resident in VMEM, state carried in registers, dt as a runtime scalar.
    n_steps, dt = 8, 0.05
    xT = odefunc_euler_integrate(x, params, dt, n_steps=n_steps, nonlinear=True)
    xT = jax.block_until_ready(xT)
    refT = _reference_euler(x, params, n_steps=n_steps, dt=dt, nonlinear=True)
    assert xT.shape == (B, D)
    assert jnp.allclose(xT, refT, atol=1e-3, rtol=1e-3), "euler mismatch vs reference"

    print("KERNEL_OK")
</pallas_src>

<mosaic_0001>
module attributes {stable_mosaic.version = 11 : i64} {
  func.func @_odefunc_kernel(%arg0: i32, %arg1: memref<32x256xf32, #tpu.memory_space<vmem>>, %arg2: memref<64x32xf32, #tpu.memory_space<vmem>>, %arg3: memref<64x1xf32, #tpu.memory_space<vmem>>, %arg4: memref<32x64xf32, #tpu.memory_space<vmem>>, %arg5: memref<32x1xf32, #tpu.memory_space<vmem>>, %arg6: memref<32x256xf32, #tpu.memory_space<vmem>>) attributes {dimension_semantics = [#tpu.dimension_semantics<parallel>], iteration_bounds = array<i64: 1>, scalar_prefetch = 0 : i64, scratch_operands = 0 : i64, tpu.core_type = #tpu.core_type<tc>, window_params = [{transform_indices = @transform_0, window_bounds = array<i64: 32, 256>}, {pipeline_mode = #tpu.pipeline_mode<synchronous>, transform_indices = @transform_1, window_bounds = array<i64: 64, 32>}, {pipeline_mode = #tpu.pipeline_mode<synchronous>, transform_indices = @transform_2, window_bounds = array<i64: 64, 1>}, {pipeline_mode = #tpu.pipeline_mode<synchronous>, transform_indices = @transform_3, window_bounds = array<i64: 32, 64>}, {pipeline_mode = #tpu.pipeline_mode<synchronous>, transform_indices = @transform_4, window_bounds = array<i64: 32, 1>}, {transform_indices = @transform_5, window_bounds = array<i64: 32, 256>}]} {
    %c0 = arith.constant 0 : index
    %c0_0 = arith.constant 0 : index
    %0 = vector.load %arg1[%c0, %c0_0] : memref<32x256xf32, #tpu.memory_space<vmem>>, vector<32x256xf32>
    %c0_1 = arith.constant 0 : index
    %c0_2 = arith.constant 0 : index
    %1 = vector.load %arg2[%c0_1, %c0_2] : memref<64x32xf32, #tpu.memory_space<vmem>>, vector<64x32xf32>
    %c0_3 = arith.constant 0 : index
    %c0_4 = arith.constant 0 : index
    %2 = vector.load %arg3[%c0_3, %c0_4] : memref<64x1xf32, #tpu.memory_space<vmem>>, vector<64x1xf32>
    %c0_5 = arith.constant 0 : index
    %c0_6 = arith.constant 0 : index
    %3 = vector.load %arg4[%c0_5, %c0_6] : memref<32x64xf32, #tpu.memory_space<vmem>>, vector<32x64xf32>
    %c0_7 = arith.constant 0 : index
    %c0_8 = arith.constant 0 : index
    %4 = vector.load %arg5[%c0_7, %c0_8] : memref<32x1xf32, #tpu.memory_space<vmem>>, vector<32x1xf32>
    %cst = arith.constant dense<0.000000e+00> : vector<64x256xf32>
    %5 = tpu.matmul %1, %0, %cst {dimension_numbers = #tpu.dot_dimension_numbers<[1], [0], [0], [1], [0, 0, 1, 1], [], []>} : vector<64x32xf32>, vector<32x256xf32>, vector<64x256xf32> -> vector<64x256xf32>
    %6 = vector.broadcast %2 : vector<64x1xf32> to vector<64x256xf32>
    %7 = arith.addf %5, %6 : vector<64x256xf32>
    %8 = math.tanh %7 : vector<64x256xf32>
    %cst_9 = arith.constant dense<0.000000e+00> : vector<32x256xf32>
    %9 = tpu.matmul %3, %8, %cst_9 {dimension_numbers = #tpu.dot_dimension_numbers<[1], [0], [0], [1], [0, 0, 1, 1], [], []>} : vector<32x64xf32>, vector<64x256xf32>, vector<32x256xf32> -> vector<32x256xf32>
    %10 = vector.broadcast %4 : vector<32x1xf32> to vector<32x256xf32>
    %11 = arith.addf %9, %10 : vector<32x256xf32>
    %12 = math.tanh %11 : vector<32x256xf32>
    %c0_10 = arith.constant 0 : index
    %c0_11 = arith.constant 0 : index
    %13 = vector.load %arg6[%c0_10, %c0_11] : memref<32x256xf32, #tpu.memory_space<vmem>>, vector<32x256xf32>
    tpu.vector_store %arg6[%c0_10, %c0_11], %12 {strides = array<i32>} : memref<32x256xf32, #tpu.memory_space<vmem>>, vector<32x256xf32>,
    return
  }
  func.func @transform_0(%arg0: i32) -> (i32, i32) {
    %c0_i32 = arith.constant 0 : i32
    %c0_i32_0 = arith.constant 0 : i32
    return %c0_i32, %arg0 : i32, i32
  }
  func.func @transform_1(%arg0: i32) -> (i32, i32) {
    %c0_i32 = arith.constant 0 : i32
    %c0_i32_0 = arith.constant 0 : i32
    %c0_i32_1 = arith.constant 0 : i32
    return %c0_i32, %c0_i32_0 : i32, i32
  }
  func.func @transform_2(%arg0: i32) -> (i32, i32) {
    %c0_i32 = arith.constant 0 : i32
    %c0_i32_0 = arith.constant 0 : i32
    %c0_i32_1 = arith.constant 0 : i32
    return %c0_i32, %c0_i32_0 : i32, i32
  }
  func.func @transform_3(%arg0: i32) -> (i32, i32) {
    %c0_i32 = arith.constant 0 : i32
    %c0_i32_0 = arith.constant 0 : i32
    %c0_i32_1 = arith.constant 0 : i32
    return %c0_i32, %c0_i32_0 : i32, i32
  }
  func.func @transform_4(%arg0: i32) -> (i32, i32) {
    %c0_i32 = arith.constant 0 : i32
    %c0_i32_0 = arith.constant 0 : i32
    %c0_i32_1 = arith.constant 0 : i32
    return %c0_i32, %c0_i32_0 : i32, i32
  }
  func.func @transform_5(%arg0: i32) -> (i32, i32) {
    %c0_i32 = arith.constant 0 : i32
    %c0_i32_0 = arith.constant 0 : i32
    return %c0_i32, %arg0 : i32, i32
  }
}

</mosaic_0001>

<llo_original>
// kernel: odefunc_forward.1
$region0: #{odefunc_forward.1}
  #allocation0 [shape = 'u32[]', space=smem, size = 0x4, offset = 0x4, fixed_abs, tag = 'smem constant byte address 0x4 - core index']
  #allocation1 [shape = 'u32[144,128]{1,0:T(1,128)}', space=vmem, size = 0x12000, scoped, tag = 'internal scratch']
  %s0 = inlined_call_operand.vmem [shape: f32[32,256], index: 0, kind: input, shape index: {}]
  %s1 = inlined_call_operand.vmem [shape: f32[64,32], index: 1, kind: input, shape index: {}]
  %s2 = inlined_call_operand.vmem [shape: f32[64,1], index: 2, kind: input, shape index: {}]
  %s3 = inlined_call_operand.vmem [shape: f32[32,64], index: 3, kind: input, shape index: {}]
  %s4 = inlined_call_operand.vmem [shape: f32[32,1], index: 4, kind: input, shape index: {}]
  %s5 = inlined_call_operand.hbm [shape: f32[32,256], index: 5, kind: output, shape index: {}]
  %s6 = sld [smem:[#allocation0]]
  $region30: #{odefunc_forward.1} parent=0
    _
  %s8 = ssub.s32 1, %s6
  %s9 = scalar_select 0, %s8, %s6
  $region1: #{odefunc_forward.1} parent=0
    #allocation2 [shape = 'u8[32768]{0}', space=vmem, size = 0x8000, scoped, tag = 'output window, operand 0, single buffered']
    #allocation3 [shape = 's32[1]{0}', space=sflag, size = 0x4, scoped, tag = 'scoped memory for odefunc_forward.1']
    %10 = vsyncpa [#allocation3], 0
    // Predicated region
    $region2: #{odefunc_forward.1} parent=1 // pred_check
      _
    $region3: #{odefunc_forward.1} parent=1 // pred_check_branch
      %12 = sbr.rel (0) target = $region5
    $region4: #{odefunc_forward.1} parent=1 // pred_region
      _
    $region5: #{odefunc_forward.1} parent=1 // pred_fallthru
      _
    // Predicated region
    $region6: #{odefunc_forward.1} parent=1 // pred_check
      _
    $region7: #{odefunc_forward.1} parent=1 // pred_check_branch
      %14 = sbr.rel (0) target = $region9
    $region8: #{odefunc_forward.1} parent=1 // pred_region
      _
    $region9: #{odefunc_forward.1} parent=1 // pred_fallthru
      _
    // Predicated region
    $region10: #{odefunc_forward.1} parent=1 // pred_check
      _
    $region11: #{odefunc_forward.1} parent=1 // pred_check_branch
      %16 = sbr.rel (0) target = $region13
    $region12: #{odefunc_forward.1} parent=1 // pred_region
      _
    $region13: #{odefunc_forward.1} parent=1 // pred_fallthru
      _
    // Predicated region
    $region14: #{odefunc_forward.1} parent=1 // pred_check
      _
    $region15: #{odefunc_forward.1} parent=1 // pred_check_branch
      %18 = sbr.rel (0) target = $region17
    $region16: #{odefunc_forward.1} parent=1 // pred_region
      _
    $region17: #{odefunc_forward.1} parent=1 // pred_fallthru
      _
    // Predicated region
    $region18: #{odefunc_forward.1} parent=1 // pred_check
      _
    $region19: #{odefunc_forward.1} parent=1 // pred_check_branch
      %20 = sbr.rel (0) target = $region21
    $region20: #{odefunc_forward.1} parent=1 // pred_region
      _
    $region21: #{odefunc_forward.1} parent=1 // pred_fallthru
      _
    %v21 = vld [vmem:[%s0] sm:$0xff]
    %v22 = vld [vmem:[%s0 + $0x8] sm:$0xff]
    %v23 = vld [vmem:[%s0 + $0x10] sm:$0xff]
    %v24 = vld [vmem:[%s0 + $0x18] sm:$0xff]
    %v25 = vld [vmem:[%s0 + $0x20] sm:$0xff]
    %v26 = vld [vmem:[%s0 + $0x28] sm:$0xff]
    %v27 = vld [vmem:[%s0 + $0x30] sm:$0xff]
    %v28 = vld [vmem:[%s0 + $0x38] sm:$0xff]
    %v29 = vld [vmem:[%s1] sm:$0xff]
    %v30 = vld [vmem:[%s1 + $0x8] sm:$0xff]
    %v31 = vld [vmem:[%s1 + $0x10] sm:$0xff]
    %v32 = vld [vmem:[%s1 + $0x18] sm:$0xff]
    %v33 = vld [vmem:[%s1 + $0x20] sm:$0xff]
    %v34 = vld [vmem:[%s1 + $0x28] sm:$0xff]
    %v35 = vld [vmem:[%s1 + $0x30] sm:$0xff]
    %v36 = vld [vmem:[%s1 + $0x38] sm:$0xff]
    %v37 = vld [vmem:[%s2] sm:$0xff]
    %v38 = vld [vmem:[%s2 + $0x8] sm:$0xff]
    %v39 = vld [vmem:[%s2 + $0x10] sm:$0xff]
    %v40 = vld [vmem:[%s2 + $0x18] sm:$0xff]
    %v41 = vld [vmem:[%s2 + $0x20] sm:$0xff]
    %v42 = vld [vmem:[%s2 + $0x28] sm:$0xff]
    %v43 = vld [vmem:[%s2 + $0x30] sm:$0xff]
    %v44 = vld [vmem:[%s2 + $0x38] sm:$0xff]
    %v45 = vld [vmem:[%s3] sm:$0xff]
    %v46 = vld [vmem:[%s3 + $0x8] sm:$0xff]
    %v47 = vld [vmem:[%s3 + $0x10] sm:$0xff]
    %v48 = vld [vmem:[%s3 + $0x18] sm:$0xff]
    %v49 = vld [vmem:[%s4] sm:$0xff]
    %v50 = vld [vmem:[%s4 + $0x8] sm:$0xff]
    %v51 = vld [vmem:[%s4 + $0x10] sm:$0xff]
    %v52 = vld [vmem:[%s4 + $0x18] sm:$0xff]
    %54 = vset.pattern.permute.xlu0 0
    %55 = vperm.xlu0 %54, %v37
    %v56 = vpop.permute.xlu0 %55
    %59 = vset.pattern.permute.xlu0 0
    %60 = vperm.xlu0 %59, %v38
    %v61 = vpop.permute.xlu0 %60
    %64 = vset.pattern.permute.xlu0 0
    %65 = vperm.xlu0 %64, %v39
    %v66 = vpop.permute.xlu0 %65
    %69 = vset.pattern.permute.xlu0 0
    %70 = vperm.xlu0 %69, %v40
    %v71 = vpop.permute.xlu0 %70
    %74 = vset.pattern.permute.xlu0 0
    %75 = vperm.xlu0 %74, %v41
    %v76 = vpop.permute.xlu0 %75
    %79 = vset.pattern.permute.xlu0 0
    %80 = vperm.xlu0 %79, %v42
    %v81 = vpop.permute.xlu0 %80
    %84 = vset.pattern.permute.xlu0 0
    %85 = vperm.xlu0 %84, %v43
    %v86 = vpop.permute.xlu0 %85
    %89 = vset.pattern.permute.xlu0 0
    %90 = vperm.xlu0 %89, %v44
    %v91 = vpop.permute.xlu0 %90
    %vm93 = vcmask 261120
    %v95 = vsel %vm93, %v29, 0
    %v98 = vsel %vm93, %v30, 0
    %v101 = vsel %vm93, %v31, 0
    %v104 = vsel %vm93, %v32, 0
    %v107 = vsel %vm93, %v33, 0
    %v110 = vsel %vm93, %v34, 0
    %v113 = vsel %vm93, %v35, 0
    %v116 = vsel %vm93, %v36, 0
    %118 = vmatprep.subr.mxu0 %v22
    %119 = vmatpush1.msra.mxu0 %v21
    %120 = vmatprep.subr.mxu0 %v24
    %121 = vmatpush1.msra.mxu0 %v23
    %122 = vmatprep.subr.mxu0 %v26
    %123 = vmatpush1.msra.mxu0 %v25
    %124 = vmatprep.subr.mxu0 %v28
    %125 = vmatpush1.msra.mxu0 %v27
    %126 = vmatprep.subr.mxu0 0.0
    %127 = vmatpush1.msra.mxu0 0.0
    %128 = vmatprep.subr.mxu0 0.0
    %129 = vmatpush1.msra.mxu0 0.0
    %130 = vmatprep.subr.mxu0 0.0
    %131 = vmatpush1.msra.mxu0 0.0
    %132 = vmatprep.subr.mxu0 0.0
    %133 = vmatpush1.msra.mxu0 0.0
    %134 = vmatprep.subr.mxu0 0.0
    %135 = vmatpush1.msra.mxu0 0.0
    %136 = vmatprep.subr.mxu0 0.0
    %137 = vmatpush1.msra.mxu0 0.0
    %138 = vmatprep.subr.mxu0 0.0
    %139 = vmatpush1.msra.mxu0 0.0
    %140 = vmatprep.subr.mxu0 0.0
    %141 = vmatpush1.msra.mxu0 0.0
    %142 = vmatprep.subr.mxu0 0.0
    %143 = vmatpush1.msra.mxu0 0.0
    %144 = vmatprep.subr.mxu0 0.0
    %145 = vmatpush1.msra.mxu0 0.0
    %146 = vmatprep.subr.mxu0 0.0
    %147 = vmatpush1.msra.mxu0 0.0
    %148 = vmatprep.subr.mxu0 0.0
    %149 = vmatpush1.msra.mxu0 0.0
    %150 = vmatprep.subr.mxu0 0.0
    %151 = vmatpush1.msra.mxu0 0.0
    %152 = vmatprep.subr.mxu0 0.0
    %153 = vmatpush1.msra.mxu0 0.0
    %154 = vmatprep.subr.mxu0 0.0
    %155 = vmatpush1.msra.mxu0 0.0
    %156 = vmatprep.subr.mxu0 0.0
    %157 = vmatpush1.msra.mxu0 0.0
    %158 = vmatprep.subr.mxu0 0.0
    %159 = vmatpush1.msra.mxu0 0.0
    %160 = vmatprep.subr.mxu0 0.0
    %161 = vmatpush1.msra.mxu0 0.0
    %162 = vmatprep.subr.mxu0 0.0
    %163 = vmatpush1.msra.mxu0 0.0
    %164 = vmatprep.subr.mxu0 0.0
    %165 = vmatpush1.msra.mxu0 0.0
    %166 = vmatprep.subr.mxu0 0.0
    %167 = vmatpush1.msra.mxu0 0.0
    %168 = vmatprep.subr.mxu0 0.0
    %169 = vmatpush1.msra.mxu0 0.0
    %170 = vmatprep.subr.mxu0 0.0
    %171 = vmatpush1.msra.mxu0 0.0
    %172 = vmatprep.subr.mxu0 0.0
    %173 = vmatpush1.msra.mxu0 0.0
    %174 = vmatprep.subr.mxu0 0.0
    %175 = vmatpush1.msra.mxu0 0.0
    %176 = vmatprep.subr.mxu0 0.0
    %177 = vmatpush1.msra.mxu0 0.0
    %178 = vmatprep.subr.mxu0 0.0
    %179 = vmatpush1.msra.mxu0 0.0
    %180 = vmatprep.subr.mxu0 0.0
    %181 = vmatpush1.msra.mxu0 0.0
    %182 = vmatprep.mubr.f32.mxu0 0.0
    %183 = vmatmul.mubr.f32.gmra.mrb[0].mxu0 %v95
    %v184 = vpop.f32.mrb[0].mxu0
    %v185 = vadd.f32 %v56, %v184
    %v186 = vpop.f32.mrb[0].mxu0
    %v187 = vadd.f32 %v56, %v186
    %188 = vmatprep.mubr.f32.mxu0 0.0
    %189 = vmatmul.mubr.f32.gmra.mrb[0].mxu0 %v98
    %v190 = vpop.f32.mrb[0].mxu0
    %v191 = vadd.f32 %v61, %v190
    %v192 = vpop.f32.mrb[0].mxu0
    %v193 = vadd.f32 %v61, %v192
    %194 = vmatprep.mubr.f32.mxu0 0.0
    %195 = vmatmul.mubr.f32.gmra.mrb[0].mxu0 %v101
    %v196 = vpop.f32.mrb[0].mxu0
    %v197 = vadd.f32 %v66, %v196
    %v198 = vpop.f32.mrb[0].mxu0
    %v199 = vadd.f32 %v66, %v198
    %200 = vmatprep.mubr.f32.mxu0 0.0
    %201 = vmatmul.mubr.f32.gmra.mrb[0].mxu0 %v104
    %v202 = vpop.f32.mrb[0].mxu0
    %v203 = vadd.f32 %v71, %v202
    %v204 = vpop.f32.mrb[0].mxu0
    %v205 = vadd.f32 %v71, %v204
    %206 = vmatprep.mubr.f32.mxu0 0.0
    %207 = vmatmul.mubr.f32.gmra.mrb[0].mxu0 %v107
    %v208 = vpop.f32.mrb[0].mxu0
    %v209 = vadd.f32 %v76, %v208
    %v210 = vpop.f32.mrb[0].mxu0
    %v211 = vadd.f32 %v76, %v210
    %212 = vmatprep.mubr.f32.mxu0 0.0
    %213 = vmatmul.mubr.f32.gmra.mrb[0].mxu0 %v110
    %v214 = vpop.f32.mrb[0].mxu0
    %v215 = vadd.f32 %v81, %v214
    %v216 = vpop.f32.mrb[0].mxu0
    %v217 = vadd.f32 %v81, %v216
    %218 = vmatprep.mubr.f32.mxu0 0.0
    %219 = vmatmul.mubr.f32.gmra.mrb[0].mxu0 %v113
    %v220 = vpop.f32.mrb[0].mxu0
    %v221 = vadd.f32 %v86, %v220
    %v222 = vpop.f32.mrb[0].mxu0
    %v223 = vadd.f32 %v86, %v222
    %224 = vmatprep.mubr.f32.mxu0 0.0
    %225 = vmatmul.mubr.f32.gmra.mrb[0].mxu0 %v116
    %v226 = vpop.f32.mrb[0].mxu0
    %v227 = vadd.f32 %v91, %v226
    %v228 = vpop.f32.mrb[0].mxu0
    %v229 = vadd.f32 %v91, %v228
    %230 = vdwg.mxu0
    %v231 = vtanh.pop %v185
    %v232 = vtanh.pop %v187
    %v233 = vtanh.pop %v191
    %v234 = vtanh.pop %v193
    %v235 = vtanh.pop %v197
    %v236 = vtanh.pop %v199
    %v237 = vtanh.pop %v203
    %v238 = vtanh.pop %v205
    %v239 = vtanh.pop %v209
    %v240 = vtanh.pop %v211
    %v241 = vtanh.pop %v215
    %v242 = vtanh.pop %v217
    %v243 = vtanh.pop %v221
    %v244 = vtanh.pop %v223
    %v245 = vtanh.pop %v227
    %v246 = vtanh.pop %v229
    %248 = vset.pattern.permute.xlu0 0
    %249 = vperm.xlu0 %248, %v49
    %v250 = vpop.permute.xlu0 %249
    %253 = vset.pattern.permute.xlu0 0
    %254 = vperm.xlu0 %253, %v50
    %v255 = vpop.permute.xlu0 %254
    %258 = vset.pattern.permute.xlu0 0
    %259 = vperm.xlu0 %258, %v51
    %v260 = vpop.permute.xlu0 %259
    %263 = vset.pattern.permute.xlu0 0
    %264 = vperm.xlu0 %263, %v52
    %v265 = vpop.permute.xlu0 %264
    %vm267 = vcmask 523264
    %v269 = vsel %vm267, %v45, 0
    %v272 = vsel %vm267, %v46, 0
    %v275 = vsel %vm267, %v47, 0
    %v278 = vsel %vm267, %v48, 0
    %280 = vmatprep.subr.mxu0 %v232
    %281 = vmatpush1.msra.mxu0 %v231
    %282 = vmatprep.subr.mxu0 %v234
    %283 = vmatpush1.msra.mxu0 %v233
    %284 = vmatprep.subr.mxu0 %v236
    %285 = vmatpush1.msra.mxu0 %v235
    %286 = vmatprep.subr.mxu0 %v238
    %287 = vmatpush1.msra.mxu0 %v237
    %288 = vmatprep.subr.mxu0 %v240
    %289 = vmatpush1.msra.mxu0 %v239
    %290 = vmatprep.subr.mxu0 %v242
    %291 = vmatpush1.msra.mxu0 %v241
    %292 = vmatprep.subr.mxu0 %v244
    %293 = vmatpush1.msra.mxu0 %v243
    %294 = vmatprep.subr.mxu0 %v246
    %295 = vmatpush1.msra.mxu0 %v245
    %296 = vmatprep.subr.mxu0 0.0
    %297 = vmatpush1.msra.mxu0 0.0
    %298 = vmatprep.subr.mxu0 0.0
    %299 = vmatpush1.msra.mxu0 0.0
    %300 = vmatprep.subr.mxu0 0.0
    %301 = vmatpush1.msra.mxu0 0.0
    %302 = vmatprep.subr.mxu0 0.0
    %303 = vmatpush1.msra.mxu0 0.0
    %304 = vmatprep.subr.mxu0 0.0
    %305 = vmatpush1.msra.mxu0 0.0
    %306 = vmatprep.subr.mxu0 0.0
    %307 = vmatpush1.msra.mxu0 0.0
    %308 = vmatprep.subr.mxu0 0.0
    %309 = vmatpush1.msra.mxu0 0.0
    %310 = vmatprep.subr.mxu0 0.0
    %311 = vmatpush1.msra.mxu0 0.0
    %312 = vmatprep.subr.mxu0 0.0
    %313 = vmatpush1.msra.mxu0 0.0
    %314 = vmatprep.subr.mxu0 0.0
    %315 = vmatpush1.msra.mxu0 0.0
    %316 = vmatprep.subr.mxu0 0.0
    %317 = vmatpush1.msra.mxu0 0.0
    %318 = vmatprep.subr.mxu0 0.0
    %319 = vmatpush1.msra.mxu0 0.0
    %320 = vmatprep.subr.mxu0 0.0
    %321 = vmatpush1.msra.mxu0 0.0
    %322 = vmatprep.subr.mxu0 0.0
    %323 = vmatpush1.msra.mxu0 0.0
    %324 = vmatprep.subr.mxu0 0.0
    %325 = vmatpush1.msra.mxu0 0.0
    %326 = vmatprep.subr.mxu0 0.0
    %327 = vmatpush1.msra.mxu0 0.0
    %328 = vmatprep.subr.mxu0 0.0
    %329 = vmatpush1.msra.mxu0 0.0
    %330 = vmatprep.subr.mxu0 0.0
    %331 = vmatpush1.msra.mxu0 0.0
    %332 = vmatprep.subr.mxu0 0.0
    %333 = vmatpush1.msra.mxu0 0.0
    %334 = vmatprep.subr.mxu0 0.0
    %335 = vmatpush1.msra.mxu0 0.0
    %336 = vmatprep.subr.mxu0 0.0
    %337 = vmatpush1.msra.mxu0 0.0
    %338 = vmatprep.subr.mxu0 0.0
    %339 = vmatpush1.msra.mxu0 0.0
    %340 = vmatprep.subr.mxu0 0.0
    %341 = vmatpush1.msra.mxu0 0.0
    %342 = vmatprep.subr.mxu0 0.0
    %343 = vmatpush1.msra.mxu0 0.0
    %344 = vmatprep.mubr.f32.mxu0 0.0
    %345 = vmatmul.mubr.f32.gmra.mrb[0].mxu0 %v269
    %v346 = vpop.f32.mrb[0].mxu0
    %v347 = vadd.f32 %v250, %v346
    %v348 = vpop.f32.mrb[0].mxu0
    %v349 = vadd.f32 %v250, %v348
    %350 = vmatprep.mubr.f32.mxu0 0.0
    %351 = vmatmul.mubr.f32.gmra.mrb[0].mxu0 %v272
    %v352 = vpop.f32.mrb[0].mxu0
    %v353 = vadd.f32 %v255, %v352
    %v354 = vpop.f32.mrb[0].mxu0
    %v355 = vadd.f32 %v255, %v354
    %356 = vmatprep.mubr.f32.mxu0 0.0
    %357 = vmatmul.mubr.f32.gmra.mrb[0].mxu0 %v275
    %v358 = vpop.f32.mrb[0].mxu0
    %v359 = vadd.f32 %v260, %v358
    %v360 = vpop.f32.mrb[0].mxu0
    %v361 = vadd.f32 %v260, %v360
    %362 = vmatprep.mubr.f32.mxu0 0.0
    %363 = vmatmul.mubr.f32.gmra.mrb[0].mxu0 %v278
    %v364 = vpop.f32.mrb[0].mxu0
    %v365 = vadd.f32 %v265, %v364
    %v366 = vpop.f32.mrb[0].mxu0
    %v367 = vadd.f32 %v265, %v366
    %368 = vdwg.mxu0
    %v369 = vtanh.pop %v347
    %v370 = vtanh.pop %v349
    %v371 = vtanh.pop %v353
    %v372 = vtanh.pop %v355
    %v373 = vtanh.pop %v359
    %v374 = vtanh.pop %v361
    %v375 = vtanh.pop %v365
    %v376 = vtanh.pop %v367
    %377 = vst [vmem:[#allocation2] sm:$0xff] %v369
    %378 = vst [vmem:[#allocation2 + $0x8] sm:$0xff] %v370
    %379 = vst [vmem:[#allocation2 + $0x10] sm:$0xff] %v371
    %380 = vst [vmem:[#allocation2 + $0x18] sm:$0xff] %v372
    %381 = vst [vmem:[#allocation2 + $0x20] sm:$0xff] %v373
    %382 = vst [vmem:[#allocation2 + $0x28] sm:$0xff] %v374
    %383 = vst [vmem:[#allocation2 + $0x30] sm:$0xff] %v375
    %384 = vst [vmem:[#allocation2 + $0x38] sm:$0xff] %v376
    // Predicated region
    $region22: #{odefunc_forward.1} parent=1 // pred_check
      _
    $region23: #{odefunc_forward.1} parent=1 // pred_check_branch
      %386 = sbr.rel (0) target = $region25
    $region24: #{odefunc_forward.1} parent=1 // pred_region
      %s388 = ssub.s32 1024, 1024
      %389 = vsyncadd [#allocation3], %s388
      %s390 = sshll.u32 [#allocation2], 4
      %s391 = int_to_ptr.vmem [resolvable:$true] %s390
      %396 = dma.vmem_to_hbm [thread:$0]  %s391, 1024, %s5, [#allocation3], 256, 256, 16
    $region25: #{odefunc_forward.1} parent=1 // pred_fallthru
      _
    // Predicated region
    $region26: #{odefunc_forward.1} parent=1 // pred_check
      _
    $region27: #{odefunc_forward.1} parent=1 // pred_check_branch
      %398 = sbr.rel (0) target = $region29
    $region28: #{odefunc_forward.1} parent=1 // pred_region
      %399 = dma.done [#allocation3], 1024
    $region29: #{odefunc_forward.1} parent=1 // pred_fallthru
      _
    %400 = vsyncpa [#allocation3], 1

</llo_original>
